<compile_context>
chip_gen: v7x
topology: tpu7x:2x2x1
jax: 0.10.0
libtpu: 0.0.40
codegen_flags: <defaults>
</compile_context>

<pallas_src>
import functools

import jax
import jax.numpy as jnp
from jax.experimental import pallas as pl
from jax.experimental.pallas import tpu as pltpu

LRELU_SLOPE = 0.1


def get_padding(kernel_size, dilation=1):
    return int((kernel_size * dilation - dilation) / 2)


def _round_up(x, m):
    return (x + m - 1) // m * m


def _leaky_relu(x):
    return jnp.where(x > 0, x, LRELU_SLOPE * x)


def _effective_weight(v, g):
    # weight_norm: w = g * v / ||v||, norm per output channel over (C_in, K)
    norm = jnp.sqrt(jnp.sum(v * v, axis=(1, 2), keepdims=True))
    return g * v / norm


def _resblock2_kernel(lens_ref,                        # SMEM [B] int32 (scalar prefetch)
                      xl_ref, xc_ref, xr_ref,          # x: left halo / centre / right halo
                      w1_ref, b1_ref, w2_ref, b2_ref,  # conv params (resident in VMEM)
                      o_ref,                           # out block (1, tT, C)
                      *, tT, K, d1, d2, pad1, pad2, HB, matmul_dtype):
    b = pl.program_id(0)
    t = pl.program_id(1)
    length = lens_ref[b]

    W = tT + 2 * HB            # assembled time window (layer-1 conv input)
    W1 = tT + 2 * pad2         # layer-1 output / layer-2 conv input window
    off1 = HB - pad2           # window row of the first layer-1 output position

    # Assemble the contiguous window x[t*tT - HB : t*tT + tT + HB] (all pieces
    # are sublane-aligned: HB and tT are multiples of 8).
    xl = xl_ref[0].astype(jnp.float32)                 # (HB, C)
    xc = xc_ref[0].astype(jnp.float32)                 # (tT, C)
    xr = xr_ref[0].astype(jnp.float32)                 # (HB, C)
    xw = jnp.concatenate([xl, xc, xr], axis=0)         # (W, C)

    # In-kernel length mask; also zeroes the garbage halo rows loaded at the
    # sequence boundaries (where the neighbour block index was clamped).
    pos = t * tT - HB + jax.lax.broadcasted_iota(jnp.int32, (W, 1), 0)
    maskw = jnp.logical_and(pos >= 0, pos < length).astype(jnp.float32)  # (W, 1)

    # ---- layer 1: LeakyReLU -> mask -> Conv1d(dilation=d1) -> + residual ----
    # Computed over the extended window so layer 2 has its halo locally.
    xt0 = _leaky_relu(xw) * maskw                                         # (W, C)
    acc1 = xw[off1:off1 + W1, :] + b1_ref[...].astype(jnp.float32)        # residual + bias
    for k in range(K):                                 # dilated conv = K shifted matmuls
        s = off1 - pad1 + k * d1
        acc1 = acc1 + jnp.dot(xt0[s:s + W1, :].astype(matmul_dtype),
                              w1_ref[k].astype(matmul_dtype),
                              preferred_element_type=jnp.float32)

    # ---- layer 2: LeakyReLU -> mask -> Conv1d(dilation=d2) -> + residual ----
    mask1 = maskw[off1:off1 + W1, :]
    xt1 = _leaky_relu(acc1) * mask1                                       # (W1, C)
    acc2 = acc1[pad2:pad2 + tT, :] + b2_ref[...].astype(jnp.float32)
    for k in range(K):
        s = k * d2
        acc2 = acc2 + jnp.dot(xt1[s:s + tT, :].astype(matmul_dtype),
                              w2_ref[k].astype(matmul_dtype),
                              preferred_element_type=jnp.float32)

    # final mask multiply + store (lane-dense (tT, C) block)
    o_ref[0] = (acc2 * maskw[HB:HB + tT, :]).astype(o_ref.dtype)


def resblock2_forward(x_bct, lengths, params, kernel_size=3, dilation=(1, 3),
                      time_tile=None, matmul_dtype=None):
    """Fused Pallas ResBlock2 forward.

    x_bct:   [B, C, T] activations.
    lengths: [B] int32 valid lengths (x_mask[b, 0, t] == (t < lengths[b])).
    params:  [(v, g, bias), (v, g, bias)] weight_norm Conv1d params,
             v, g: [C_out, C_in, K] / [C_out, 1, 1], bias: [C_out].
    """
    # TODO(synk): arbitrary (non prefix-length) x_mask would need a mask input
    # stream instead of scalar-prefetched lengths.
    assert len(dilation) == 2 and len(params) == 2
    B, C, T = x_bct.shape
    K = kernel_size
    d1, d2 = dilation
    pad1, pad2 = get_padding(K, d1), get_padding(K, d2)
    H = pad1 + pad2
    HB = max(8, _round_up(H, 8))            # halo fetched as HB-row aligned blocks

    if matmul_dtype is None:
        matmul_dtype = jnp.bfloat16 if x_bct.dtype == jnp.bfloat16 else jnp.float32

    # ---- channels-last layout + effective (weight-normed) conv weights ----
    x = jnp.transpose(x_bct, (0, 2, 1))                     # [B, T, C]
    ws, bs = [], []
    for (v, g, bias) in params:
        w = _effective_weight(v, g)                         # [C_out, C_in, K]
        ws.append(jnp.transpose(w, (2, 1, 0)))              # [K, C_in, C_out]
        bs.append(bias.reshape(1, C))
    w1, w2 = ws
    b1, b2 = bs

    # ---- time tiling: multiple of HB, bounded VMEM footprint ----
    if time_tile is None:
        target_bytes = 1 << 19                              # ~512 KiB per x tile
        time_tile = max(HB, min(1024, target_bytes // max(1, C * x.dtype.itemsize)))
    tT = max(HB, _round_up(min(int(time_tile), T), HB))
    Tp = _round_up(T, tT)
    if Tp != T:                                             # only for ragged T
        x = jnp.pad(x, ((0, 0), (0, Tp - T), (0, 0)))
    nT = Tp // tT
    nhb = tT // HB
    last_hb = Tp // HB - 1

    lengths = lengths.astype(jnp.int32)

    kernel = functools.partial(
        _resblock2_kernel, tT=tT, K=K, d1=d1, d2=d2,
        pad1=pad1, pad2=pad2, HB=HB, matmul_dtype=matmul_dtype)

    cost = pl.CostEstimate(
        flops=2 * 2 * B * Tp * K * C * C,
        transcendentals=0,
        bytes_accessed=(2 * B * Tp * C + 2 * K * C * C + 2 * C) * x.dtype.itemsize)

    out = pl.pallas_call(
        kernel,
        out_shape=jax.ShapeDtypeStruct((B, Tp, C), x.dtype),
        grid_spec=pltpu.PrefetchScalarGridSpec(
            num_scalar_prefetch=1,
            grid=(B, nT),
            in_specs=[
                # left halo: HB rows ending at t*tT (clamped at sequence start;
                # the clamped garbage rows are zeroed by the in-kernel mask)
                pl.BlockSpec((1, HB, C),
                             lambda b, t, lens: (b, jnp.maximum(t * nhb - 1, 0), 0)),
                # centre tile
                pl.BlockSpec((1, tT, C), lambda b, t, lens: (b, t, 0)),
                # right halo: HB rows starting at (t+1)*tT (clamped at the end)
                pl.BlockSpec((1, HB, C),
                             lambda b, t, lens: (b, jnp.minimum((t + 1) * nhb, last_hb), 0)),
                # conv params: constant index_map -> fetched once, stay in VMEM
                pl.BlockSpec((K, C, C), lambda b, t, lens: (0, 0, 0)),
                pl.BlockSpec((1, C), lambda b, t, lens: (0, 0)),
                pl.BlockSpec((K, C, C), lambda b, t, lens: (0, 0, 0)),
                pl.BlockSpec((1, C), lambda b, t, lens: (0, 0)),
            ],
            out_specs=pl.BlockSpec((1, tT, C), lambda b, t, lens: (b, t, 0)),
        ),
        compiler_params=pltpu.CompilerParams(
            dimension_semantics=("parallel", "parallel"),
            vmem_limit_bytes=32 * 1024 * 1024),
        cost_estimate=cost,
    )(lengths, x, x, x, w1, b1, w2, b2)

    return jnp.transpose(out[:, :T, :], (0, 2, 1))          # back to [B, C, T]


def resblock2_reference(x, x_mask, params, kernel_size=3, dilation=(1, 3)):
    """Pure-JAX reference mirroring the PyTorch forward."""
    for i, d in enumerate(dilation):
        v, g, b = params[i]
        w = _effective_weight(v, g)
        xt = jnp.where(x > 0, x, LRELU_SLOPE * x) * x_mask
        pad = get_padding(kernel_size, d)
        y = jax.lax.conv_general_dilated(
            xt, w, window_strides=(1,), padding=[(pad, pad)],
            rhs_dilation=(d,), dimension_numbers=('NCH', 'OIH', 'NCH'))
        x = y + b[None, :, None] + x
    return x * x_mask


if __name__ == "__main__":
    B, C, T = 2, 8, 32
    K = 3
    dilation = (1, 3)

    key = jax.random.PRNGKey(0)
    k_x, k_w0, k_b0, k_w1, k_b1 = jax.random.split(key, 5)

    x = jax.random.normal(k_x, (B, C, T), dtype=jnp.float32)
    lengths = jnp.array([T, 25], dtype=jnp.int32)
    x_mask = (jnp.arange(T)[None, None, :] < lengths[:, None, None]).astype(jnp.float32)

    # weight_norm(Conv1d)-style params after init_weights: v ~ N(0, 0.01),
    # g = ||v|| (effective w == v initially), small bias.
    def make_layer_params(kw, kb):
        v = 0.01 * jax.random.normal(kw, (C, C, K), dtype=jnp.float32)
        g = jnp.sqrt(jnp.sum(v * v, axis=(1, 2), keepdims=True))
        b = 0.1 * jax.random.normal(kb, (C,), dtype=jnp.float32)
        return (v, g, b)

    params = [make_layer_params(k_w0, k_b0), make_layer_params(k_w1, k_b1)]

    ref = jax.block_until_ready(
        resblock2_reference(x, x_mask, params, kernel_size=K, dilation=dilation))

    # f32 MXU path, two time tiles (exercises the halo exchange across tiles).
    out = jax.block_until_ready(
        resblock2_forward(x, lengths, params, kernel_size=K, dilation=dilation,
                          time_tile=16, matmul_dtype=jnp.float32))
    assert out.shape == (B, C, T)
    assert jnp.allclose(out, ref, atol=1e-5, rtol=1e-5), (
        f"f32 max abs err {jnp.max(jnp.abs(out - ref))}")

    # bf16 MXU feed (f32 accumulation), as recommended for v6e/v7x.
    out_bf16 = jax.block_until_ready(
        resblock2_forward(x, lengths, params, kernel_size=K, dilation=dilation,
                          time_tile=16, matmul_dtype=jnp.bfloat16))
    assert jnp.allclose(out_bf16, ref, atol=5e-2, rtol=5e-2), (
        f"bf16 max abs err {jnp.max(jnp.abs(out_bf16 - ref))}")

    # Ragged T (not a multiple of the time tile) exercises the pad/slice path.
    T2 = 40
    x2 = jax.random.normal(jax.random.PRNGKey(1), (B, C, T2), dtype=jnp.float32)
    lengths2 = jnp.array([T2, 33], dtype=jnp.int32)
    mask2 = (jnp.arange(T2)[None, None, :] < lengths2[:, None, None]).astype(jnp.float32)
    ref2 = jax.block_until_ready(
        resblock2_reference(x2, mask2, params, kernel_size=K, dilation=dilation))
    out2 = jax.block_until_ready(
        resblock2_forward(x2, lengths2, params, kernel_size=K, dilation=dilation,
                          time_tile=16, matmul_dtype=jnp.float32))
    assert jnp.allclose(out2, ref2, atol=1e-5, rtol=1e-5), (
        f"ragged max abs err {jnp.max(jnp.abs(out2 - ref2))}")

    print("KERNEL_OK")
</pallas_src>

<mosaic_0001>
module attributes {stable_mosaic.version = 11 : i64} {
  func.func @_resblock2_kernel(%arg0: i32, %arg1: i32, %arg2: memref<2xi32, #tpu.memory_space<smem>>, %arg3: memref<1x8x8xf32, #tpu.memory_space<vmem>>, %arg4: memref<1x16x8xf32, #tpu.memory_space<vmem>>, %arg5: memref<1x8x8xf32, #tpu.memory_space<vmem>>, %arg6: memref<3x8x8xf32, #tpu.memory_space<vmem>>, %arg7: memref<1x8xf32, #tpu.memory_space<vmem>>, %arg8: memref<3x8x8xf32, #tpu.memory_space<vmem>>, %arg9: memref<1x8xf32, #tpu.memory_space<vmem>>, %arg10: memref<1x16x8xf32, #tpu.memory_space<vmem>>) attributes {dimension_semantics = [#tpu.dimension_semantics<parallel>, #tpu.dimension_semantics<parallel>], iteration_bounds = array<i64: 2, 2>, scalar_prefetch = 1 : i64, scratch_operands = 0 : i64, tpu.core_type = #tpu.core_type<tc>, window_params = [{transform_indices = @transform_0, window_bounds = array<i64: 1, 8, 8>}, {transform_indices = @transform_1, window_bounds = array<i64: 1, 16, 8>}, {transform_indices = @transform_2, window_bounds = array<i64: 1, 8, 8>}, {pipeline_mode = #tpu.pipeline_mode<synchronous>, transform_indices = @transform_3, window_bounds = array<i64: 3, 8, 8>}, {pipeline_mode = #tpu.pipeline_mode<synchronous>, transform_indices = @transform_4, window_bounds = array<i64: 1, 8>}, {pipeline_mode = #tpu.pipeline_mode<synchronous>, transform_indices = @transform_5, window_bounds = array<i64: 3, 8, 8>}, {pipeline_mode = #tpu.pipeline_mode<synchronous>, transform_indices = @transform_6, window_bounds = array<i64: 1, 8>}, {transform_indices = @transform_7, window_bounds = array<i64: 1, 16, 8>}]} {
    %0 = arith.index_cast %arg0 : i32 to index
    %1 = memref.load %arg2[%0] : memref<2xi32, #tpu.memory_space<smem>>
    %c0 = arith.constant 0 : index
    %c0_0 = arith.constant 0 : index
    %c0_1 = arith.constant 0 : index
    %2 = vector.load %arg3[%c0, %c0_0, %c0_1] : memref<1x8x8xf32, #tpu.memory_space<vmem>>, vector<1x8x8xf32>
    %3 = vector.shape_cast %2 : vector<1x8x8xf32> to vector<8x8xf32>
    %c0_2 = arith.constant 0 : index
    %c0_3 = arith.constant 0 : index
    %c0_4 = arith.constant 0 : index
    %4 = vector.load %arg4[%c0_2, %c0_3, %c0_4] : memref<1x16x8xf32, #tpu.memory_space<vmem>>, vector<1x16x8xf32>
    %5 = vector.shape_cast %4 : vector<1x16x8xf32> to vector<16x8xf32>
    %c0_5 = arith.constant 0 : index
    %c0_6 = arith.constant 0 : index
    %c0_7 = arith.constant 0 : index
    %6 = vector.load %arg5[%c0_5, %c0_6, %c0_7] : memref<1x8x8xf32, #tpu.memory_space<vmem>>, vector<1x8x8xf32>
    %7 = vector.shape_cast %6 : vector<1x8x8xf32> to vector<8x8xf32>
    %8 = tpu.concatenate %3, %5, %7 in 0 : vector<8x8xf32>, vector<16x8xf32>, vector<8x8xf32> -> vector<32x8xf32>
    %c16_i32 = arith.constant 16 : i32
    %9 = arith.muli %arg1, %c16_i32 : i32
    %c8_i32 = arith.constant 8 : i32
    %10 = arith.subi %9, %c8_i32 : i32
    %11 = tpu.iota {dimensions = array<i32: 0>} : vector<32x1xi32>
    %12 = vector.broadcast %10 : i32 to vector<32x1xi32>
    %13 = arith.addi %12, %11 : vector<32x1xi32>
    %c0_i32 = arith.constant 0 : i32
    %14 = vector.broadcast %c0_i32 : i32 to vector<32x1xi32>
    %15 = arith.cmpi sge, %13, %14 : vector<32x1xi32>
    %16 = vector.broadcast %1 : i32 to vector<32x1xi32>
    %17 = arith.cmpi slt, %13, %16 : vector<32x1xi32>
    %18 = arith.andi %15, %17 : vector<32x1xi1>
    %19 = arith.extui %18 : vector<32x1xi1> to vector<32x1xi32>
    %20 = arith.sitofp %19 : vector<32x1xi32> to vector<32x1xf32>
    %cst = arith.constant 0.000000e+00 : f32
    %21 = vector.broadcast %cst : f32 to vector<32x8xf32>
    %22 = arith.cmpf ogt, %8, %21 : vector<32x8xf32>
    %cst_8 = arith.constant 1.000000e-01 : f32
    %23 = vector.broadcast %cst_8 : f32 to vector<32x8xf32>
    %24 = arith.mulf %23, %8 : vector<32x8xf32>
    %25 = arith.select %22, %8, %24 : vector<32x8xi1>, vector<32x8xf32>
    %26 = vector.broadcast %20 : vector<32x1xf32> to vector<32x8xf32>
    %27 = arith.mulf %25, %26 : vector<32x8xf32>
    %28 = vector.extract_strided_slice %8 {offsets = [5, 0], sizes = [22, 8], strides = [1, 1]} : vector<32x8xf32> to vector<22x8xf32>
    %c0_9 = arith.constant 0 : index
    %c0_10 = arith.constant 0 : index
    %29 = vector.load %arg7[%c0_9, %c0_10] : memref<1x8xf32, #tpu.memory_space<vmem>>, vector<1x8xf32>
    %30 = vector.broadcast %29 : vector<1x8xf32> to vector<22x8xf32>
    %31 = arith.addf %28, %30 : vector<22x8xf32>
    %32 = vector.extract_strided_slice %27 {offsets = [4, 0], sizes = [22, 8], strides = [1, 1]} : vector<32x8xf32> to vector<22x8xf32>
    %c0_11 = arith.constant 0 : index
    %c0_12 = arith.constant 0 : index
    %c0_13 = arith.constant 0 : index
    %33 = vector.load %arg6[%c0_11, %c0_12, %c0_13] : memref<3x8x8xf32, #tpu.memory_space<vmem>>, vector<1x8x8xf32>
    %34 = vector.shape_cast %33 : vector<1x8x8xf32> to vector<8x8xf32>
    %cst_14 = arith.constant dense<0.000000e+00> : vector<22x8xf32>
    %35 = tpu.matmul %32, %34, %cst_14 {dimension_numbers = #tpu.dot_dimension_numbers<[1], [0], [0], [1], [0, 0, 1, 1], [], []>} : vector<22x8xf32>, vector<8x8xf32>, vector<22x8xf32> -> vector<22x8xf32>
    %36 = arith.addf %31, %35 : vector<22x8xf32>
    %37 = vector.extract_strided_slice %27 {offsets = [5, 0], sizes = [22, 8], strides = [1, 1]} : vector<32x8xf32> to vector<22x8xf32>
    %c1 = arith.constant 1 : index
    %c0_15 = arith.constant 0 : index
    %c0_16 = arith.constant 0 : index
    %38 = vector.load %arg6[%c1, %c0_15, %c0_16] : memref<3x8x8xf32, #tpu.memory_space<vmem>>, vector<1x8x8xf32>
    %39 = vector.shape_cast %38 : vector<1x8x8xf32> to vector<8x8xf32>
    %cst_17 = arith.constant dense<0.000000e+00> : vector<22x8xf32>
    %40 = tpu.matmul %37, %39, %cst_17 {dimension_numbers = #tpu.dot_dimension_numbers<[1], [0], [0], [1], [0, 0, 1, 1], [], []>} : vector<22x8xf32>, vector<8x8xf32>, vector<22x8xf32> -> vector<22x8xf32>
    %41 = arith.addf %36, %40 : vector<22x8xf32>
    %42 = vector.extract_strided_slice %27 {offsets = [6, 0], sizes = [22, 8], strides = [1, 1]} : vector<32x8xf32> to vector<22x8xf32>
    %c2 = arith.constant 2 : index
    %c0_18 = arith.constant 0 : index
    %c0_19 = arith.constant 0 : index
    %43 = vector.load %arg6[%c2, %c0_18, %c0_19] : memref<3x8x8xf32, #tpu.memory_space<vmem>>, vector<1x8x8xf32>
    %44 = vector.shape_cast %43 : vector<1x8x8xf32> to vector<8x8xf32>
    %cst_20 = arith.constant dense<0.000000e+00> : vector<22x8xf32>
    %45 = tpu.matmul %42, %44, %cst_20 {dimension_numbers = #tpu.dot_dimension_numbers<[1], [0], [0], [1], [0, 0, 1, 1], [], []>} : vector<22x8xf32>, vector<8x8xf32>, vector<22x8xf32> -> vector<22x8xf32>
    %46 = arith.addf %41, %45 : vector<22x8xf32>
    %47 = vector.extract_strided_slice %20 {offsets = [5, 0], sizes = [22, 1], strides = [1, 1]} : vector<32x1xf32> to vector<22x1xf32>
    %cst_21 = arith.constant 0.000000e+00 : f32
    %48 = vector.broadcast %cst_21 : f32 to vector<22x8xf32>
    %49 = arith.cmpf ogt, %46, %48 : vector<22x8xf32>
    %cst_22 = arith.constant 1.000000e-01 : f32
    %50 = vector.broadcast %cst_22 : f32 to vector<22x8xf32>
    %51 = arith.mulf %50, %46 : vector<22x8xf32>
    %52 = arith.select %49, %46, %51 : vector<22x8xi1>, vector<22x8xf32>
    %53 = vector.broadcast %47 : vector<22x1xf32> to vector<22x8xf32>
    %54 = arith.mulf %52, %53 : vector<22x8xf32>
    %55 = vector.extract_strided_slice %46 {offsets = [3, 0], sizes = [16, 8], strides = [1, 1]} : vector<22x8xf32> to vector<16x8xf32>
    %c0_23 = arith.constant 0 : index
    %c0_24 = arith.constant 0 : index
    %56 = vector.load %arg9[%c0_23, %c0_24] : memref<1x8xf32, #tpu.memory_space<vmem>>, vector<1x8xf32>
    %57 = vector.broadcast %56 : vector<1x8xf32> to vector<16x8xf32>
    %58 = arith.addf %55, %57 : vector<16x8xf32>
    %59 = vector.extract_strided_slice %54 {offsets = [0, 0], sizes = [16, 8], strides = [1, 1]} : vector<22x8xf32> to vector<16x8xf32>
    %c0_25 = arith.constant 0 : index
    %c0_26 = arith.constant 0 : index
    %c0_27 = arith.constant 0 : index
    %60 = vector.load %arg8[%c0_25, %c0_26, %c0_27] : memref<3x8x8xf32, #tpu.memory_space<vmem>>, vector<1x8x8xf32>
    %61 = vector.shape_cast %60 : vector<1x8x8xf32> to vector<8x8xf32>
    %cst_28 = arith.constant dense<0.000000e+00> : vector<16x8xf32>
    %62 = tpu.matmul %59, %61, %cst_28 {dimension_numbers = #tpu.dot_dimension_numbers<[1], [0], [0], [1], [0, 0, 1, 1], [], []>} : vector<16x8xf32>, vector<8x8xf32>, vector<16x8xf32> -> vector<16x8xf32>
    %63 = arith.addf %58, %62 : vector<16x8xf32>
    %64 = vector.extract_strided_slice %54 {offsets = [3, 0], sizes = [16, 8], strides = [1, 1]} : vector<22x8xf32> to vector<16x8xf32>
    %c1_29 = arith.constant 1 : index
    %c0_30 = arith.constant 0 : index
    %c0_31 = arith.constant 0 : index
    %65 = vector.load %arg8[%c1_29, %c0_30, %c0_31] : memref<3x8x8xf32, #tpu.memory_space<vmem>>, vector<1x8x8xf32>
    %66 = vector.shape_cast %65 : vector<1x8x8xf32> to vector<8x8xf32>
    %cst_32 = arith.constant dense<0.000000e+00> : vector<16x8xf32>
    %67 = tpu.matmul %64, %66, %cst_32 {dimension_numbers = #tpu.dot_dimension_numbers<[1], [0], [0], [1], [0, 0, 1, 1], [], []>} : vector<16x8xf32>, vector<8x8xf32>, vector<16x8xf32> -> vector<16x8xf32>
    %68 = arith.addf %63, %67 : vector<16x8xf32>
    %69 = vector.extract_strided_slice %54 {offsets = [6, 0], sizes = [16, 8], strides = [1, 1]} : vector<22x8xf32> to vector<16x8xf32>
    %c2_33 = arith.constant 2 : index
    %c0_34 = arith.constant 0 : index
    %c0_35 = arith.constant 0 : index
    %70 = vector.load %arg8[%c2_33, %c0_34, %c0_35] : memref<3x8x8xf32, #tpu.memory_space<vmem>>, vector<1x8x8xf32>
    %71 = vector.shape_cast %70 : vector<1x8x8xf32> to vector<8x8xf32>
    %cst_36 = arith.constant dense<0.000000e+00> : vector<16x8xf32>
    %72 = tpu.matmul %69, %71, %cst_36 {dimension_numbers = #tpu.dot_dimension_numbers<[1], [0], [0], [1], [0, 0, 1, 1], [], []>} : vector<16x8xf32>, vector<8x8xf32>, vector<16x8xf32> -> vector<16x8xf32>
    %73 = arith.addf %68, %72 : vector<16x8xf32>
    %74 = vector.extract_strided_slice %20 {offsets = [8, 0], sizes = [16, 1], strides = [1, 1]} : vector<32x1xf32> to vector<16x1xf32>
    %75 = vector.broadcast %74 : vector<16x1xf32> to vector<16x8xf32>
    %76 = arith.mulf %73, %75 : vector<16x8xf32>
    %c0_37 = arith.constant 0 : index
    %c0_38 = arith.constant 0 : index
    %c0_39 = arith.constant 0 : index
    %77 = vector.load %arg10[%c0_37, %c0_38, %c0_39] : memref<1x16x8xf32, #tpu.memory_space<vmem>>, vector<1x16x8xf32>
    %78 = vector.shape_cast %77 : vector<1x16x8xf32> to vector<16x8xf32>
    %79 = vector.shape_cast %76 : vector<16x8xf32> to vector<1x16x8xf32>
    tpu.vector_store %arg10[%c0_37, %c0_38, %c0_39], %79 {strides = array<i32>} : memref<1x16x8xf32, #tpu.memory_space<vmem>>, vector<1x16x8xf32>,
    return
  }
  func.func @transform_0(%arg0: i32, %arg1: i32, %arg2: memref<2xi32, #tpu.memory_space<smem>>) -> (i32, i32, i32) {
    %c2_i32 = arith.constant 2 : i32
    %0 = arith.muli %arg1, %c2_i32 : i32
    %c1_i32 = arith.constant 1 : i32
    %1 = arith.subi %0, %c1_i32 : i32
    %c0_i32 = arith.constant 0 : i32
    %2 = arith.maxsi %1, %c0_i32 : i32
    %c0_i32_0 = arith.constant 0 : i32
    %c0_i32_1 = arith.constant 0 : i32
    return %arg0, %2, %c0_i32_0 : i32, i32, i32
  }
  func.func @transform_1(%arg0: i32, %arg1: i32, %arg2: memref<2xi32, #tpu.memory_space<smem>>) -> (i32, i32, i32) {
    %c0_i32 = arith.constant 0 : i32
    %c0_i32_0 = arith.constant 0 : i32
    return %arg0, %arg1, %c0_i32 : i32, i32, i32
  }
  func.func @transform_2(%arg0: i32, %arg1: i32, %arg2: memref<2xi32, #tpu.memory_space<smem>>) -> (i32, i32, i32) {
    %c1_i32 = arith.constant 1 : i32
    %0 = arith.addi %arg1, %c1_i32 : i32
    %c2_i32 = arith.constant 2 : i32
    %1 = arith.muli %0, %c2_i32 : i32
    %c3_i32 = arith.constant 3 : i32
    %2 = arith.minsi %1, %c3_i32 : i32
    %c0_i32 = arith.constant 0 : i32
    %c0_i32_0 = arith.constant 0 : i32
    return %arg0, %2, %c0_i32 : i32, i32, i32
  }
  func.func @transform_3(%arg0: i32, %arg1: i32, %arg2: memref<2xi32, #tpu.memory_space<smem>>) -> (i32, i32, i32) {
    %c0_i32 = arith.constant 0 : i32
    %c0_i32_0 = arith.constant 0 : i32
    %c0_i32_1 = arith.constant 0 : i32
    %c0_i32_2 = arith.constant 0 : i32
    return %c0_i32, %c0_i32_0, %c0_i32_1 : i32, i32, i32
  }
  func.func @transform_4(%arg0: i32, %arg1: i32, %arg2: memref<2xi32, #tpu.memory_space<smem>>) -> (i32, i32) {
    %c0_i32 = arith.constant 0 : i32
    %c0_i32_0 = arith.constant 0 : i32
    %c0_i32_1 = arith.constant 0 : i32
    return %c0_i32, %c0_i32_0 : i32, i32
  }
  func.func @transform_5(%arg0: i32, %arg1: i32, %arg2: memref<2xi32, #tpu.memory_space<smem>>) -> (i32, i32, i32) {
    %c0_i32 = arith.constant 0 : i32
    %c0_i32_0 = arith.constant 0 : i32
    %c0_i32_1 = arith.constant 0 : i32
    %c0_i32_2 = arith.constant 0 : i32
    return %c0_i32, %c0_i32_0, %c0_i32_1 : i32, i32, i32
  }
  func.func @transform_6(%arg0: i32, %arg1: i32, %arg2: memref<2xi32, #tpu.memory_space<smem>>) -> (i32, i32) {
    %c0_i32 = arith.constant 0 : i32
    %c0_i32_0 = arith.constant 0 : i32
    %c0_i32_1 = arith.constant 0 : i32
    return %c0_i32, %c0_i32_0 : i32, i32
  }
  func.func @transform_7(%arg0: i32, %arg1: i32, %arg2: memref<2xi32, #tpu.memory_space<smem>>) -> (i32, i32, i32) {
    %c0_i32 = arith.constant 0 : i32
    %c0_i32_0 = arith.constant 0 : i32
    return %arg0, %arg1, %c0_i32 : i32, i32, i32
  }
}

</mosaic_0001>

<llo_original>
// kernel: tpu_custom_call.1
$region0: #{tpu_custom_call.1}
  #allocation0 [shape = 'u32[]', space=smem, size = 0x4, offset = 0x4, fixed_abs, tag = 'smem constant byte address 0x4 - core index']
  #allocation1 [shape = 'u32[144,128]{1,0:T(1,128)}', space=vmem, size = 0x12000, scoped, tag = 'internal scratch']
  #allocation2 [shape = 's32[1]{0}', space=sflag, size = 0x4, scoped, tag = 'scoped memory for tpu_custom_call.1']
  #allocation3 [shape = 'u8[512]{0}', space=smem, size = 0x200, scoped, tag = 'prefetched SMEM operand 0']
  %s0 = inlined_call_operand.vmem [shape: s32[2], index: 0, kind: input, shape index: {}]
  %s1 = inlined_call_operand.vmem [shape: f32[2,32,8], index: 1, kind: input, shape index: {}]
  %s2 = inlined_call_operand.vmem [shape: f32[2,32,8], index: 2, kind: input, shape index: {}]
  %s3 = inlined_call_operand.vmem [shape: f32[2,32,8], index: 3, kind: input, shape index: {}]
  %s4 = inlined_call_operand.vmem [shape: f32[3,8,8], index: 4, kind: input, shape index: {}]
  %s5 = inlined_call_operand.vmem [shape: f32[1,8], index: 5, kind: input, shape index: {}]
  %s6 = inlined_call_operand.vmem [shape: f32[3,8,8], index: 6, kind: input, shape index: {}]
  %s7 = inlined_call_operand.vmem [shape: f32[1,8], index: 7, kind: input, shape index: {}]
  %s8 = inlined_call_operand.vmem [shape: f32[2,32,8], index: 8, kind: output, shape index: {}]
  %s9 = sld [smem:[#allocation0]]
  $region61: #{tpu_custom_call.1} parent=0
    _
  %s11 = ssub.s32 1, %s9
  %s12 = scalar_select 0, %s11, %s9
  %s13 = sshll.u32 %s0, 4
  %s14 = int_to_ptr.vmem [resolvable:$true] %s13
  %16 = dma.vmem_to_smem %s14, 16, [#allocation3], [#allocation2]
  %17 = dma.done [#allocation2], 16
  %18 = sfence
  loop: start=0, step=1, limit=6
  $region2: #{tpu_custom_call.1} parent=0 // loop_pre_header
    _
  $region3: #{tpu_custom_call.1} parent=0 // loop_header
    %s20 = sphi 0, %s24
    %p21 = scmp.ge.s32.totalorder %s20, 6
    %s27 = sphi 0, %s39
    %s28 = sphi 0, %s35
    %s29 = sphi 0, %s27
    %s30 = sphi 0, %s28
    %s31 = sphi 0, %s29
    %s32 = sphi 0, %s30
    %s52 = sphi 0, %s54
    %s55 = sphi 0, %s52
    %s56 = sphi 0, %s55
    %s72 = sphi 0, %s56
    %s80 = sphi 0, %s82
    %s83 = sphi 0, %s80
    %s84 = sphi 0, %s83
    %s100 = sphi 0, %s84
    %s116 = sphi 0, %s118
    %s119 = sphi 0, %s116
    %s120 = sphi 0, %s119
    %s136 = sphi 0, %s120
    %s140 = sphi 0, %s140
    %s142 = sphi 0, %s140
    %s143 = sphi 0, %s142
    %s157 = sphi 0, %s143
    %s161 = sphi 0, %s161
    %s163 = sphi 0, %s161
    %s164 = sphi 0, %s163
    %s178 = sphi 0, %s164
    %s182 = sphi 0, %s182
    %s184 = sphi 0, %s182
    %s185 = sphi 0, %s184
    %s199 = sphi 0, %s185
    %s203 = sphi 0, %s203
    %s205 = sphi 0, %s203
    %s206 = sphi 0, %s205
    %s220 = sphi 0, %s206
    %s228 = sphi 0, %s230
    %s231 = sphi 0, %s228
    %s232 = sphi 0, %s231
    %s248 = sphi 0, %s232
  $region4: #{tpu_custom_call.1} parent=0 // loop_header_branch
    %23 = sbr.rel (%p21) target = $region8
  $region5: #{tpu_custom_call.1} parent=0 // loop_body
    %s25 = ssub.s32 %s20, 1
    %s26 = ssub.s32 %s20, 2
    %s33 = sadd.s32 1, %s28
    %p34 = scmp.ge.s32.totalorder %s33, 2
    %s35 = scalar_select %p34, 0, %s33
    %s36 = sadd.s32 1, %s27
    %s37 = scalar_select %p34, %s36, %s27
    %p38 = scmp.ge.s32.totalorder %s37, 2
    %s39 = scalar_select %p38, 0, %s37
    %s40 = smul.u32 %s28, 2
    %s41 = ssub.s32 %s40, 1
    %p42 = scmp.gt.s32.totalorder %s41, 0
    %s43 = scalar_select %p42, %s41, 0
    %s44 = smul.u32 %s35, 2
    %s45 = ssub.s32 %s44, 1
    %p46 = scmp.gt.s32.totalorder %s45, 0
    %s47 = scalar_select %p46, %s45, 0
    %s48 = ssub.s32 %s27, %s39
    %s49 = ssub.s32 %s43, %s47
    %s50 = sor.u32 %s48, %s49
    %p51 = scmp.eq.s32.totalorder %s50, 0
    %s53 = sadd.s32 %s52, 1
    %s54 = scalar_select %p51, %s52, %s53
    %p57 = pneg %p51
    %p58 = scmp.eq.s32.totalorder %s20, 3
    %p59 = por %p57, %p58
    %p60 = scmp.ne.s32.totalorder %s52, %s55
    %p61 = scmp.eq.s32.totalorder %s20, 0
    %p62 = por %p60, %p61
    %p63 = scmp.ne.s32.totalorder %s52, %s55
    %p64 = scmp.eq.s32.totalorder %s25, 3
    %p65 = por %p63, %p64
    %p66 = scmp.ne.s32.totalorder %s55, %s56
    %p67 = scmp.eq.s32.totalorder %s25, 0
    %p68 = por %p66, %p67
    %p69 = scmp.ne.s32.totalorder %s55, %s56
    %p70 = scmp.eq.s32.totalorder %s26, 3
    %p71 = por %p69, %p70
    %p73 = scmp.ne.s32.totalorder %s56, %s72
    %p74 = scmp.eq.s32.totalorder %s26, 0
    %p75 = por %p73, %p74
    %s76 = ssub.s32 %s27, %s39
    %s77 = ssub.s32 %s28, %s35
    %s78 = sor.u32 %s76, %s77
    %p79 = scmp.eq.s32.totalorder %s78, 0
    %s81 = sadd.s32 %s80, 1
    %s82 = scalar_select %p79, %s80, %s81
    %p85 = pneg %p79
    %p86 = scmp.eq.s32.totalorder %s20, 3
    %p87 = por %p85, %p86
    %p88 = scmp.ne.s32.totalorder %s80, %s83
    %p89 = scmp.eq.s32.totalorder %s20, 0
    %p90 = por %p88, %p89
    %p91 = scmp.ne.s32.totalorder %s80, %s83
    %p92 = scmp.eq.s32.totalorder %s25, 3
    %p93 = por %p91, %p92
    %p94 = scmp.ne.s32.totalorder %s83, %s84
    %p95 = scmp.eq.s32.totalorder %s25, 0
    %p96 = por %p94, %p95
    %p97 = scmp.ne.s32.totalorder %s83, %s84
    %p98 = scmp.eq.s32.totalorder %s26, 3
    %p99 = por %p97, %p98
    %p101 = scmp.ne.s32.totalorder %s84, %s100
    %p102 = scmp.eq.s32.totalorder %s26, 0
    %p103 = por %p101, %p102
    %s104 = sadd.s32 %s28, 1
    %s105 = smul.u32 %s104, 2
    %p106 = scmp.lt.s32.totalorder %s105, 3
    %s107 = scalar_select %p106, %s105, 3
    %s108 = sadd.s32 %s35, 1
    %s109 = smul.u32 %s108, 2
    %p110 = scmp.lt.s32.totalorder %s109, 3
    %s111 = scalar_select %p110, %s109, 3
    %s112 = ssub.s32 %s27, %s39
    %s113 = ssub.s32 %s107, %s111
    %s114 = sor.u32 %s112, %s113
    %p115 = scmp.eq.s32.totalorder %s114, 0
    %s117 = sadd.s32 %s116, 1
    %s118 = scalar_select %p115, %s116, %s117
    %p121 = pneg %p115
    %p122 = scmp.eq.s32.totalorder %s20, 3
    %p123 = por %p121, %p122
    %p124 = scmp.ne.s32.totalorder %s116, %s119
    %p125 = scmp.eq.s32.totalorder %s20, 0
    %p126 = por %p124, %p125
    %p127 = scmp.ne.s32.totalorder %s116, %s119
    %p128 = scmp.eq.s32.totalorder %s25, 3
    %p129 = por %p127, %p128
    %p130 = scmp.ne.s32.totalorder %s119, %s120
    %p131 = scmp.eq.s32.totalorder %s25, 0
    %p132 = por %p130, %p131
    %p133 = scmp.ne.s32.totalorder %s119, %s120
    %p134 = scmp.eq.s32.totalorder %s26, 3
    %p135 = por %p133, %p134
    %p137 = scmp.ne.s32.totalorder %s120, %s136
    %p138 = scmp.eq.s32.totalorder %s26, 0
    %p139 = por %p137, %p138
    %s141 = sadd.s32 %s140, 1
    %p144 = scmp.eq.s32.totalorder %s20, 3
    %p145 = scmp.ne.s32.totalorder %s140, %s142
    %p146 = scmp.eq.s32.totalorder %s20, 0
    %p147 = por %p145, %p146
    %p148 = scmp.ne.s32.totalorder %s140, %s142
    %p149 = scmp.eq.s32.totalorder %s25, 3
    %p150 = por %p148, %p149
    %p151 = scmp.ne.s32.totalorder %s142, %s143
    %p152 = scmp.eq.s32.totalorder %s25, 0
    %p153 = por %p151, %p152
    %p154 = scmp.ne.s32.totalorder %s142, %s143
    %p155 = scmp.eq.s32.totalorder %s26, 3
    %p156 = por %p154, %p155
    %p158 = scmp.ne.s32.totalorder %s143, %s157
    %p159 = scmp.eq.s32.totalorder %s26, 0
    %p160 = por %p158, %p159
    %s162 = sadd.s32 %s161, 1
    %p165 = scmp.eq.s32.totalorder %s20, 3
    %p166 = scmp.ne.s32.totalorder %s161, %s163
    %p167 = scmp.eq.s32.totalorder %s20, 0
    %p168 = por %p166, %p167
    %p169 = scmp.ne.s32.totalorder %s161, %s163
    %p170 = scmp.eq.s32.totalorder %s25, 3
    %p171 = por %p169, %p170
    %p172 = scmp.ne.s32.totalorder %s163, %s164
    %p173 = scmp.eq.s32.totalorder %s25, 0
    %p174 = por %p172, %p173
    %p175 = scmp.ne.s32.totalorder %s163, %s164
    %p176 = scmp.eq.s32.totalorder %s26, 3
    %p177 = por %p175, %p176
    %p179 = scmp.ne.s32.totalorder %s164, %s178
    %p180 = scmp.eq.s32.totalorder %s26, 0
    %p181 = por %p179, %p180
    %s183 = sadd.s32 %s182, 1
    %p186 = scmp.eq.s32.totalorder %s20, 3
    %p187 = scmp.ne.s32.totalorder %s182, %s184
    %p188 = scmp.eq.s32.totalorder %s20, 0
    %p189 = por %p187, %p188
    %p190 = scmp.ne.s32.totalorder %s182, %s184
    %p191 = scmp.eq.s32.totalorder %s25, 3
    %p192 = por %p190, %p191
    %p193 = scmp.ne.s32.totalorder %s184, %s185
    %p194 = scmp.eq.s32.totalorder %s25, 0
    %p195 = por %p193, %p194
    %p196 = scmp.ne.s32.totalorder %s184, %s185
    %p197 = scmp.eq.s32.totalorder %s26, 3
    %p198 = por %p196, %p197
    %p200 = scmp.ne.s32.totalorder %s185, %s199
    %p201 = scmp.eq.s32.totalorder %s26, 0
    %p202 = por %p200, %p201
    %s204 = sadd.s32 %s203, 1
    %p207 = scmp.eq.s32.totalorder %s20, 3
    %p208 = scmp.ne.s32.totalorder %s203, %s205
    %p209 = scmp.eq.s32.totalorder %s20, 0
    %p210 = por %p208, %p209
    %p211 = scmp.ne.s32.totalorder %s203, %s205
    %p212 = scmp.eq.s32.totalorder %s25, 3
    %p213 = por %p211, %p212
    %p214 = scmp.ne.s32.totalorder %s205, %s206
    %p215 = scmp.eq.s32.totalorder %s25, 0
    %p216 = por %p214, %p215
    %p217 = scmp.ne.s32.totalorder %s205, %s206
    %p218 = scmp.eq.s32.totalorder %s26, 3
    %p219 = por %p217, %p218
    %p221 = scmp.ne.s32.totalorder %s206, %s220
    %p222 = scmp.eq.s32.totalorder %s26, 0
    %p223 = por %p221, %p222
    %s224 = ssub.s32 %s27, %s39
    %s225 = ssub.s32 %s28, %s35
    %s226 = sor.u32 %s224, %s225
    %p227 = scmp.eq.s32.totalorder %s226, 0
    %s229 = sadd.s32 %s228, 1
    %s230 = scalar_select %p227, %s228, %s229
    %p233 = pneg %p227
    %p234 = scmp.eq.s32.totalorder %s20, 3
    %p235 = por %p233, %p234
    %p236 = scmp.ne.s32.totalorder %s228, %s231
    %p237 = scmp.eq.s32.totalorder %s20, 0
    %p238 = por %p236, %p237
    %p239 = scmp.ne.s32.totalorder %s228, %s231
    %p240 = scmp.eq.s32.totalorder %s25, 3
    %p241 = por %p239, %p240
    %p242 = scmp.ne.s32.totalorder %s231, %s232
    %p243 = scmp.eq.s32.totalorder %s25, 0
    %p244 = por %p242, %p243
    %p245 = scmp.ne.s32.totalorder %s231, %s232
    %p246 = scmp.eq.s32.totalorder %s26, 3
    %p247 = por %p245, %p246
    %p249 = scmp.ne.s32.totalorder %s232, %s248
    %p250 = scmp.eq.s32.totalorder %s26, 0
    %p251 = por %p249, %p250
    %p252 = scmp.le.s32.totalorder 1, %s20
    %p253 = scmp.lt.s32.totalorder %s20, 5
    %p254 = pnand %p252, %p253
    %p255 = pneg %p254
    // Predicated region
    $region9: #{tpu_custom_call.1} parent=5 // pred_check
      _
    $region10: #{tpu_custom_call.1} parent=5 // pred_check_branch
      %257 = sbr.rel (%p254) target = $region12
    $region11: #{tpu_custom_call.1} parent=5 // pred_region
      %s258 = ssub.s32 %s20, 1
      // Predicated region
      $region13: #{tpu_custom_call.1} parent=11 // pred_check
        %p259 = pneg %p153
      $region14: #{tpu_custom_call.1} parent=11 // pred_check_branch
        %261 = sbr.rel (%p259) target = $region16
      $region15: #{tpu_custom_call.1} parent=11 // pred_region
        _
      $region16: #{tpu_custom_call.1} parent=11 // pred_fallthru
        _
      // Predicated region
      $region17: #{tpu_custom_call.1} parent=11 // pred_check
        %p262 = pneg %p174
      $region18: #{tpu_custom_call.1} parent=11 // pred_check_branch
        %264 = sbr.rel (%p262) target = $region20
      $region19: #{tpu_custom_call.1} parent=11 // pred_region
        _
      $region20: #{tpu_custom_call.1} parent=11 // pred_fallthru
        _
      // Predicated region
      $region21: #{tpu_custom_call.1} parent=11 // pred_check
        %p265 = pneg %p195
      $region22: #{tpu_custom_call.1} parent=11 // pred_check_branch
        %267 = sbr.rel (%p265) target = $region24
      $region23: #{tpu_custom_call.1} parent=11 // pred_region
        _
      $region24: #{tpu_custom_call.1} parent=11 // pred_fallthru
        _
      // Predicated region
      $region25: #{tpu_custom_call.1} parent=11 // pred_check
        %p268 = pneg %p216
      $region26: #{tpu_custom_call.1} parent=11 // pred_check_branch
        %270 = sbr.rel (%p268) target = $region28
      $region27: #{tpu_custom_call.1} parent=11 // pred_region
        _
      $region28: #{tpu_custom_call.1} parent=11 // pred_fallthru
        _
    $region12: #{tpu_custom_call.1} parent=5 // pred_fallthru
      _
    %p271 = scmp.lt.s32.totalorder %s20, 4
    // Predicated region
    $region29: #{tpu_custom_call.1} parent=5 // pred_check
      %p272 = pneg %p271
    $region30: #{tpu_custom_call.1} parent=5 // pred_check_branch
      %274 = sbr.rel (%p272) target = $region32
    $region31: #{tpu_custom_call.1} parent=5 // pred_region
      // Predicated region
      $region33: #{tpu_custom_call.1} parent=31 // pred_check
        %p275 = pneg %p62
      $region34: #{tpu_custom_call.1} parent=31 // pred_check_branch
        %277 = sbr.rel (%p275) target = $region36
      $region35: #{tpu_custom_call.1} parent=31 // pred_region
        %s278 = smul.u32 %s28, 2
        %s279 = ssub.s32 %s278, 1
        %p280 = scmp.gt.s32.totalorder %s279, 0
        %s281 = scalar_select %p280, %s279, 0
        %p282 = scmp.lt.s32.totalorder %s27, 1
        %s283 = scalar_select %p282, %s27, 1
        %p284 = scmp.lt.s32.totalorder %s281, 3
        %s285 = scalar_select %p284, %s281, 3
        %s286 = smul.addr %s283, 4
        %s287 = sadd.s32 %s285, %s286
        %s288 = smul.addr %s287, 8
        %s289 = scalar_lea.vmem %s1, %s288
        %s290 = smul.u32 %s28, 2
        %s291 = ssub.s32 %s290, 1
        %p292 = scmp.gt.s32.totalorder %s291, 0
        %s293 = scalar_select %p292, %s291, 0
      $region36: #{tpu_custom_call.1} parent=31 // pred_fallthru
        _
      // Predicated region
      $region37: #{tpu_custom_call.1} parent=31 // pred_check
        %p294 = pneg %p90
      $region38: #{tpu_custom_call.1} parent=31 // pred_check_branch
        %296 = sbr.rel (%p294) target = $region40
      $region39: #{tpu_custom_call.1} parent=31 // pred_region
        %s297 = smul.u32 2, %s28
        %p298 = scmp.lt.s32.totalorder %s27, 1
        %s299 = scalar_select %p298, %s27, 1
        %p300 = scmp.lt.s32.totalorder %s297, 3
        %s301 = scalar_select %p300, %s297, 3
        %s302 = smul.addr %s299, 4
        %s303 = sadd.s32 %s301, %s302
        %s304 = smul.addr %s303, 8
        %s305 = scalar_lea.vmem %s2, %s304
        %s306 = smul.u32 2, %s28
      $region40: #{tpu_custom_call.1} parent=31 // pred_fallthru
        _
      // Predicated region
      $region41: #{tpu_custom_call.1} parent=31 // pred_check
        %p307 = pneg %p126
      $region42: #{tpu_custom_call.1} parent=31 // pred_check_branch
        %309 = sbr.rel (%p307) target = $region44
      $region43: #{tpu_custom_call.1} parent=31 // pred_region
        %s310 = sadd.s32 %s28, 1
        %s311 = smul.u32 %s310, 2
        %p312 = scmp.lt.s32.totalorder %s311, 3
        %s313 = scalar_select %p312, %s311, 3
        %p314 = scmp.lt.s32.totalorder %s27, 1
        %s315 = scalar_select %p314, %s27, 1
        %p316 = scmp.lt.s32.totalorder %s313, 3
        %s317 = scalar_select %p316, %s313, 3
        %s318 = smul.addr %s315, 4
        %s319 = sadd.s32 %s317, %s318
        %s320 = smul.addr %s319, 8
        %s321 = scalar_lea.vmem %s3, %s320
        %s322 = sadd.s32 %s28, 1
        %s323 = smul.u32 %s322, 2
        %p324 = scmp.lt.s32.totalorder %s323, 3
        %s325 = scalar_select %p324, %s323, 3
      $region44: #{tpu_custom_call.1} parent=31 // pred_fallthru
        _
    $region32: #{tpu_custom_call.1} parent=5 // pred_fallthru
      _
    %p326 = scmp.le.s32.totalorder 1, %s20
    %p327 = scmp.lt.s32.totalorder %s20, 5
    %p328 = pnand %p326, %p327
    %p329 = pneg %p328
    // Predicated region
    $region45: #{tpu_custom_call.1} parent=5 // pred_check
      _
    $region46: #{tpu_custom_call.1} parent=5 // pred_check_branch
      %331 = sbr.rel (%p328) target = $region48
    $region47: #{tpu_custom_call.1} parent=5 // pred_region
      %s332 = ssub.s32 %s20, 1
      %s333 = smul.u32 %s30, 2
      %s334 = ssub.s32 %s333, 1
      %p335 = scmp.gt.s32.totalorder %s334, 0
      %s336 = scalar_select %p335, %s334, 0
      %p337 = scmp.lt.s32.totalorder %s29, 1
      %s338 = scalar_select %p337, %s29, 1
      %p339 = scmp.lt.s32.totalorder %s336, 3
      %s340 = scalar_select %p339, %s336, 3
      %s341 = smul.addr %s338, 4
      %s342 = sadd.s32 %s340, %s341
      %s343 = smul.addr %s342, 8
      %s344 = scalar_lea.vmem %s1, %s343
      %p345 = pneg %p68
      %p346 = pneg %p65
      %s347 = smul.u32 2, %s30
      %p348 = scmp.lt.s32.totalorder %s29, 1
      %s349 = scalar_select %p348, %s29, 1
      %p350 = scmp.lt.s32.totalorder %s347, 3
      %s351 = scalar_select %p350, %s347, 3
      %s352 = smul.addr %s349, 4
      %s353 = sadd.s32 %s351, %s352
      %s354 = smul.addr %s353, 8
      %s355 = scalar_lea.vmem %s2, %s354
      %p356 = pneg %p96
      %p357 = pneg %p93
      %s358 = sadd.s32 %s30, 1
      %s359 = smul.u32 %s358, 2
      %p360 = scmp.lt.s32.totalorder %s359, 3
      %s361 = scalar_select %p360, %s359, 3
      %p362 = scmp.lt.s32.totalorder %s29, 1
      %s363 = scalar_select %p362, %s29, 1
      %p364 = scmp.lt.s32.totalorder %s361, 3
      %s365 = scalar_select %p364, %s361, 3
      %s366 = smul.addr %s363, 4
      %s367 = sadd.s32 %s365, %s366
      %s368 = smul.addr %s367, 8
      %s369 = scalar_lea.vmem %s3, %s368
      %p370 = pneg %p132
      %p371 = pneg %p129
      %p372 = pneg %p153
      %p373 = pneg %p150
      %p374 = pneg %p174
      %p375 = pneg %p171
      %p376 = pneg %p195
      %p377 = pneg %p192
      %p378 = pneg %p216
      %p379 = pneg %p213
      %p380 = pneg %p244
      %p381 = pneg %p241
      %s382 = smul.u32 2, %s30
      %p383 = scmp.lt.s32.totalorder %s29, 1
      %s384 = scalar_select %p383, %s29, 1
      %p385 = scmp.lt.s32.totalorder %s382, 3
      %s386 = scalar_select %p385, %s382, 3
      %s387 = smul.addr %s384, 4
      %s388 = sadd.s32 %s386, %s387
      %s389 = smul.addr %s388, 8
      %s390 = scalar_lea.vmem %s8, %s389
      %s391 = smul.u32 %s30, 2
      %s392 = ssub.s32 %s391, 1
      %p393 = scmp.gt.s32.totalorder %s392, 0
      %s394 = scalar_select %p393, %s392, 0
      %p395 = scmp.lt.s32.totalorder %s29, 1
      %s396 = scalar_select %p395, %s29, 1
      %p397 = scmp.lt.s32.totalorder %s394, 3
      %s398 = scalar_select %p397, %s394, 3
      %s399 = smul.addr %s396, 4
      %s400 = sadd.s32 %s398, %s399
      %s401 = smul.addr %s400, 8
      %s402 = scalar_lea.vmem %s1, %s401
      %s403 = smul.u32 %s30, 2
      %s404 = ssub.s32 %s403, 1
      %p405 = scmp.gt.s32.totalorder %s404, 0
      %s406 = scalar_select %p405, %s404, 0
      %s407 = smul.u32 2, %s30
      %p408 = scmp.lt.s32.totalorder %s29, 1
      %s409 = scalar_select %p408, %s29, 1
      %p410 = scmp.lt.s32.totalorder %s407, 3
      %s411 = scalar_select %p410, %s407, 3
      %s412 = smul.addr %s409, 4
      %s413 = sadd.s32 %s411, %s412
      %s414 = smul.addr %s413, 8
      %s415 = scalar_lea.vmem %s2, %s414
      %s416 = smul.u32 2, %s30
      %s417 = sadd.s32 %s30, 1
      %s418 = smul.u32 %s417, 2
      %p419 = scmp.lt.s32.totalorder %s418, 3
      %s420 = scalar_select %p419, %s418, 3
      %p421 = scmp.lt.s32.totalorder %s29, 1
      %s422 = scalar_select %p421, %s29, 1
      %p423 = scmp.lt.s32.totalorder %s420, 3
      %s424 = scalar_select %p423, %s420, 3
      %s425 = smul.addr %s422, 4
      %s426 = sadd.s32 %s424, %s425
      %s427 = smul.addr %s426, 8
      %s428 = scalar_lea.vmem %s3, %s427
      %s429 = sadd.s32 %s30, 1
      %s430 = smul.u32 %s429, 2
      %p431 = scmp.lt.s32.totalorder %s430, 3
      %s432 = scalar_select %p431, %s430, 3
      %s433 = smul.u32 2, %s30
      %p434 = scmp.lt.s32.totalorder %s29, 1
      %s435 = scalar_select %p434, %s29, 1
      %p436 = scmp.lt.s32.totalorder %s433, 3
      %s437 = scalar_select %p436, %s433, 3
      %s438 = smul.addr %s435, 4
      %s439 = sadd.s32 %s437, %s438
      %s440 = smul.addr %s439, 8
      %s441 = scalar_lea.vmem %s8, %s440
      %s442 = smul.u32 2, %s30
      %s443 = sld [smem:[#allocation3 + %s29]]
      %v444 = vld [vmem:[%s402] sm:$0xff]
      %v445 = vld [vmem:[%s415] sm:$0xff]
      %v446 = vld [vmem:[%s415 + $0x8] sm:$0xff]
      %v447 = vld [vmem:[%s428] sm:$0xff]
      %s448 = smul.u32 %s30, 16
      %s449 = ssub.s32 %s448, 8
      %v450 = vlaneseq
      %v451 = vshrl.u32 %v450, 7
      %v452 = vadd.s32 %v451, 8
      %v453 = vadd.s32 %v451, 16
      %v454 = vadd.s32 %v451, 24
      %v455 = vstv %s449
      %v456 = vadd.s32 %v455, %v451
      %v457 = vadd.s32 %v455, %v452
      %v458 = vadd.s32 %v455, %v453
      %v459 = vadd.s32 %v455, %v454
      %vm460 = vcmp.ge.s32.totalorder %v456, 0
      %vm461 = vcmp.ge.s32.totalorder %v457, 0
      %vm462 = vcmp.ge.s32.totalorder %v458, 0
      %vm463 = vcmp.ge.s32.totalorder %v459, 0
      %v464 = vstv %s443
      %vm465 = vcmp.lt.s32.totalorder %v456, %v464
      %vm466 = vcmp.lt.s32.totalorder %v457, %v464
      %vm467 = vcmp.lt.s32.totalorder %v458, %v464
      %vm468 = vcmp.lt.s32.totalorder %v459, %v464
      %vm469 = vmand %vm460, %vm465
      %vm470 = vmand %vm461, %vm466
      %vm471 = vmand %vm462, %vm467
      %vm472 = vmand %vm463, %vm468
      %v473 = vsel %vm469, 1, 0
      %v474 = vsel %vm470, 1, 0
      %v475 = vsel %vm471, 1, 0
      %v476 = vsel %vm472, 1, 0
      %v477 = vcvt.s32.f32 %v473
      %v478 = vcvt.s32.f32 %v474
      %v479 = vcvt.s32.f32 %v475
      %v480 = vcvt.s32.f32 %v476
      %vm481 = vcmp.gt.f32.partialorder %v444, 0.0
      %vm482 = vcmp.gt.f32.partialorder %v445, 0.0
      %vm483 = vcmp.gt.f32.partialorder %v446, 0.0
      %vm484 = vcmp.gt.f32.partialorder %v447, 0.0
      %v485 = vmul.f32 %v444, 0.1
      %v486 = vmul.f32 %v445, 0.1
      %v487 = vmul.f32 %v446, 0.1
      %v488 = vmul.f32 %v447, 0.1
      %v489 = vsel %vm481, %v444, %v485
      %v490 = vsel %vm482, %v445, %v486
      %v491 = vsel %vm483, %v446, %v487
      %v492 = vsel %vm484, %v447, %v488
      %v493 = vmul.f32 %v489, %v477
      %v494 = vmul.f32 %v490, %v478
      %v495 = vmul.f32 %v491, %v479
      %v496 = vmul.f32 %v492, %v480
      %v497 = vld [vmem:[%s5] sm:$0x1]
      %v499 = vlaneseq
      %v500 = vshrl.u32 %v499, 7
      %v501 = vsub.s32 0, %v500
      %v502 = vrot.slane %v497, %v501
      %v504 = vadd.f32 %v444, %v502
      %v505 = vadd.f32 %v445, %v502
      %v506 = vadd.f32 %v446, %v502
      %v507 = vadd.f32 %v447, %v502
      %v508 = vld [vmem:[%s4] sm:$0xff]
      %vm513 = vcmask 1043456
      %v514 = vrot.slane %v493, 4
      %v515 = vrot.slane %v494, 4
      %v516 = vsel %vm513, %v514, %v515
      %v517 = vrot.slane %v495, 4
      %v518 = vsel %vm513, %v515, %v517
      %v519 = vrot.slane %v496, 4
      %v520 = vsel %vm513, %v517, %v519
      %vm521 = vcmask 64512
      %v522 = vsel %vm521, %v516, 0
      %v524 = vsel %vm521, %v518, 0
      %v526 = vsel %vm521, %v520, 0
      %528 = vmatprep.subr.mxu0 0.0
      %529 = vmatpush1.msra.mxu0 %v508
      %530 = vmatprep.subr.mxu0 0.0
      %531 = vmatpush1.msra.mxu0 0.0
      %532 = vmatprep.subr.mxu0 0.0
      %533 = vmatpush1.msra.mxu0 0.0
      %534 = vmatprep.subr.mxu0 0.0
      %535 = vmatpush1.msra.mxu0 0.0
      %536 = vmatprep.subr.mxu0 0.0
      %537 = vmatpush1.msra.mxu0 0.0
      %538 = vmatprep.subr.mxu0 0.0
      %539 = vmatpush1.msra.mxu0 0.0
      %540 = vmatprep.subr.mxu0 0.0
      %541 = vmatpush1.msra.mxu0 0.0
      %542 = vmatprep.subr.mxu0 0.0
      %543 = vmatpush1.msra.mxu0 0.0
      %544 = vmatprep.subr.mxu0 0.0
      %545 = vmatpush1.msra.mxu0 0.0
      %546 = vmatprep.subr.mxu0 0.0
      %547 = vmatpush1.msra.mxu0 0.0
      %548 = vmatprep.subr.mxu0 0.0
      %549 = vmatpush1.msra.mxu0 0.0
      %550 = vmatprep.subr.mxu0 0.0
      %551 = vmatpush1.msra.mxu0 0.0
      %552 = vmatprep.subr.mxu0 0.0
      %553 = vmatpush1.msra.mxu0 0.0
      %554 = vmatprep.subr.mxu0 0.0
      %555 = vmatpush1.msra.mxu0 0.0
      %556 = vmatprep.subr.mxu0 0.0
      %557 = vmatpush1.msra.mxu0 0.0
      %558 = vmatprep.subr.mxu0 0.0
      %559 = vmatpush1.msra.mxu0 0.0
      %560 = vmatprep.subr.mxu0 0.0
      %561 = vmatpush1.msra.mxu0 0.0
      %562 = vmatprep.subr.mxu0 0.0
      %563 = vmatpush1.msra.mxu0 0.0
      %564 = vmatprep.subr.mxu0 0.0
      %565 = vmatpush1.msra.mxu0 0.0
      %566 = vmatprep.subr.mxu0 0.0
      %567 = vmatpush1.msra.mxu0 0.0
      %568 = vmatprep.subr.mxu0 0.0
      %569 = vmatpush1.msra.mxu0 0.0
      %570 = vmatprep.subr.mxu0 0.0
      %571 = vmatpush1.msra.mxu0 0.0
      %572 = vmatprep.subr.mxu0 0.0
      %573 = vmatpush1.msra.mxu0 0.0
      %574 = vmatprep.subr.mxu0 0.0
      %575 = vmatpush1.msra.mxu0 0.0
      %576 = vmatprep.subr.mxu0 0.0
      %577 = vmatpush1.msra.mxu0 0.0
      %578 = vmatprep.subr.mxu0 0.0
      %579 = vmatpush1.msra.mxu0 0.0
      %580 = vmatprep.subr.mxu0 0.0
      %581 = vmatpush1.msra.mxu0 0.0
      %582 = vmatprep.subr.mxu0 0.0
      %583 = vmatpush1.msra.mxu0 0.0
      %584 = vmatprep.subr.mxu0 0.0
      %585 = vmatpush1.msra.mxu0 0.0
      %586 = vmatprep.subr.mxu0 0.0
      %587 = vmatpush1.msra.mxu0 0.0
      %588 = vmatprep.subr.mxu0 0.0
      %589 = vmatpush1.msra.mxu0 0.0
      %590 = vmatprep.subr.mxu0 0.0
      %591 = vmatpush1.msra.mxu0 0.0
      %592 = vmatprep.mubr.f32.mxu0 0.0
      %593 = vmatmul.mubr.f32.gmra.mrb[0].mxu0 %v522
      %v594 = vpop.f32.mrb[0].mxu0
      %v595 = vadd.f32 0.0, %v594
      %v596 = vpop.f32.mrb[0].mxu0
      %597 = vmatprep.mubr.f32.mxu0 0.0
      %598 = vmatmul.mubr.f32.gmra.mrb[0].mxu0 %v524
      %v599 = vpop.f32.mrb[0].mxu0
      %v600 = vadd.f32 0.0, %v599
      %v601 = vpop.f32.mrb[0].mxu0
      %602 = vmatprep.mubr.f32.mxu0 0.0
      %603 = vmatmul.mubr.f32.gmra.mrb[0].mxu0 %v526
      %v604 = vpop.f32.mrb[0].mxu0
      %v605 = vadd.f32 0.0, %v604
      %v606 = vpop.f32.mrb[0].mxu0
      %607 = vdwg.mxu0
      %vm611 = vcmask 1044480
      %v612 = vrot.slane %v595, 3
      %v613 = vrot.slane %v600, 3
      %v614 = vsel %vm611, %v612, %v613
      %v615 = vrot.slane %v605, 3
      %v616 = vsel %vm611, %v613, %v615
      %v621 = vadd.f32 %v504, %v612
      %v622 = vadd.f32 %v505, %v614
      %v623 = vadd.f32 %v506, %v616
      %v624 = vadd.f32 %v507, %v615
      %s625 = scalar_lea.vmem %s4, 8
      %v626 = vld [vmem:[%s625] sm:$0xff]
      %vm627 = vcmask 1042432
      %v628 = vrot.slane %v493, 5
      %v629 = vrot.slane %v494, 5
      %v630 = vsel %vm627, %v628, %v629
      %v631 = vrot.slane %v495, 5
      %v632 = vsel %vm627, %v629, %v631
      %v633 = vrot.slane %v496, 5
      %v634 = vsel %vm627, %v631, %v633
      %v635 = vsel %vm521, %v630, 0
      %v637 = vsel %vm521, %v632, 0
      %v639 = vsel %vm521, %v634, 0
      %641 = vmatprep.subr.mxu0 0.0
      %642 = vmatpush1.msra.mxu0 %v626
      %643 = vmatprep.subr.mxu0 0.0
      %644 = vmatpush1.msra.mxu0 0.0
      %645 = vmatprep.subr.mxu0 0.0
      %646 = vmatpush1.msra.mxu0 0.0
      %647 = vmatprep.subr.mxu0 0.0
      %648 = vmatpush1.msra.mxu0 0.0
      %649 = vmatprep.subr.mxu0 0.0
      %650 = vmatpush1.msra.mxu0 0.0
      %651 = vmatprep.subr.mxu0 0.0
      %652 = vmatpush1.msra.mxu0 0.0
      %653 = vmatprep.subr.mxu0 0.0
      %654 = vmatpush1.msra.mxu0 0.0
      %655 = vmatprep.subr.mxu0 0.0
      %656 = vmatpush1.msra.mxu0 0.0
      %657 = vmatprep.subr.mxu0 0.0
      %658 = vmatpush1.msra.mxu0 0.0
      %659 = vmatprep.subr.mxu0 0.0
      %660 = vmatpush1.msra.mxu0 0.0
      %661 = vmatprep.subr.mxu0 0.0
      %662 = vmatpush1.msra.mxu0 0.0
      %663 = vmatprep.subr.mxu0 0.0
      %664 = vmatpush1.msra.mxu0 0.0
      %665 = vmatprep.subr.mxu0 0.0
      %666 = vmatpush1.msra.mxu0 0.0
      %667 = vmatprep.subr.mxu0 0.0
      %668 = vmatpush1.msra.mxu0 0.0
      %669 = vmatprep.subr.mxu0 0.0
      %670 = vmatpush1.msra.mxu0 0.0
      %671 = vmatprep.subr.mxu0 0.0
      %672 = vmatpush1.msra.mxu0 0.0
      %673 = vmatprep.subr.mxu0 0.0
      %674 = vmatpush1.msra.mxu0 0.0
      %675 = vmatprep.subr.mxu0 0.0
      %676 = vmatpush1.msra.mxu0 0.0
      %677 = vmatprep.subr.mxu0 0.0
      %678 = vmatpush1.msra.mxu0 0.0
      %679 = vmatprep.subr.mxu0 0.0
      %680 = vmatpush1.msra.mxu0 0.0
      %681 = vmatprep.subr.mxu0 0.0
      %682 = vmatpush1.msra.mxu0 0.0
      %683 = vmatprep.subr.mxu0 0.0
      %684 = vmatpush1.msra.mxu0 0.0
      %685 = vmatprep.subr.mxu0 0.0
      %686 = vmatpush1.msra.mxu0 0.0
      %687 = vmatprep.subr.mxu0 0.0
      %688 = vmatpush1.msra.mxu0 0.0
      %689 = vmatprep.subr.mxu0 0.0
      %690 = vmatpush1.msra.mxu0 0.0
      %691 = vmatprep.subr.mxu0 0.0
      %692 = vmatpush1.msra.mxu0 0.0
      %693 = vmatprep.subr.mxu0 0.0
      %694 = vmatpush1.msra.mxu0 0.0
      %695 = vmatprep.subr.mxu0 0.0
      %696 = vmatpush1.msra.mxu0 0.0
      %697 = vmatprep.subr.mxu0 0.0
      %698 = vmatpush1.msra.mxu0 0.0
      %699 = vmatprep.subr.mxu0 0.0
      %700 = vmatpush1.msra.mxu0 0.0
      %701 = vmatprep.subr.mxu0 0.0
      %702 = vmatpush1.msra.mxu0 0.0
      %703 = vmatprep.subr.mxu0 0.0
      %704 = vmatpush1.msra.mxu0 0.0
      %705 = vmatprep.mubr.f32.mxu0 0.0
      %706 = vmatmul.mubr.f32.gmra.mrb[0].mxu0 %v635
      %v707 = vpop.f32.mrb[0].mxu0
      %v708 = vadd.f32 0.0, %v707
      %v709 = vpop.f32.mrb[0].mxu0
      %710 = vmatprep.mubr.f32.mxu0 0.0
      %711 = vmatmul.mubr.f32.gmra.mrb[0].mxu0 %v637
      %v712 = vpop.f32.mrb[0].mxu0
      %v713 = vadd.f32 0.0, %v712
      %v714 = vpop.f32.mrb[0].mxu0
      %715 = vmatprep.mubr.f32.mxu0 0.0
      %716 = vmatmul.mubr.f32.gmra.mrb[0].mxu0 %v639
      %v717 = vpop.f32.mrb[0].mxu0
      %v718 = vadd.f32 0.0, %v717
      %v719 = vpop.f32.mrb[0].mxu0
      %720 = vdwg.mxu0
      %v724 = vrot.slane %v708, 3
      %v725 = vrot.slane %v713, 3
      %v726 = vsel %vm611, %v724, %v725
      %v727 = vrot.slane %v718, 3
      %v728 = vsel %vm611, %v725, %v727
      %v733 = vadd.f32 %v621, %v724
      %v734 = vadd.f32 %v622, %v726
      %v735 = vadd.f32 %v623, %v728
      %v736 = vadd.f32 %v624, %v727
      %s737 = scalar_lea.vmem %s4, 16
      %v738 = vld [vmem:[%s737] sm:$0xff]
      %vm739 = vcmask 1041408
      %v740 = vrot.slane %v493, 6
      %v741 = vrot.slane %v494, 6
      %v742 = vsel %vm739, %v740, %v741
      %v743 = vrot.slane %v495, 6
      %v744 = vsel %vm739, %v741, %v743
      %v745 = vrot.slane %v496, 6
      %v746 = vsel %vm739, %v743, %v745
      %v747 = vsel %vm521, %v742, 0
      %v749 = vsel %vm521, %v744, 0
      %v751 = vsel %vm521, %v746, 0
      %753 = vmatprep.subr.mxu0 0.0
      %754 = vmatpush1.msra.mxu0 %v738
      %755 = vmatprep.subr.mxu0 0.0
      %756 = vmatpush1.msra.mxu0 0.0
      %757 = vmatprep.subr.mxu0 0.0
      %758 = vmatpush1.msra.mxu0 0.0
      %759 = vmatprep.subr.mxu0 0.0
      %760 = vmatpush1.msra.mxu0 0.0
      %761 = vmatprep.subr.mxu0 0.0
      %762 = vmatpush1.msra.mxu0 0.0
      %763 = vmatprep.subr.mxu0 0.0
      %764 = vmatpush1.msra.mxu0 0.0
      %765 = vmatprep.subr.mxu0 0.0
      %766 = vmatpush1.msra.mxu0 0.0
      %767 = vmatprep.subr.mxu0 0.0
      %768 = vmatpush1.msra.mxu0 0.0
      %769 = vmatprep.subr.mxu0 0.0
      %770 = vmatpush1.msra.mxu0 0.0
      %771 = vmatprep.subr.mxu0 0.0
      %772 = vmatpush1.msra.mxu0 0.0
      %773 = vmatprep.subr.mxu0 0.0
      %774 = vmatpush1.msra.mxu0 0.0
      %775 = vmatprep.subr.mxu0 0.0
      %776 = vmatpush1.msra.mxu0 0.0
      %777 = vmatprep.subr.mxu0 0.0
      %778 = vmatpush1.msra.mxu0 0.0
      %779 = vmatprep.subr.mxu0 0.0
      %780 = vmatpush1.msra.mxu0 0.0
      %781 = vmatprep.subr.mxu0 0.0
      %782 = vmatpush1.msra.mxu0 0.0
      %783 = vmatprep.subr.mxu0 0.0
      %784 = vmatpush1.msra.mxu0 0.0
      %785 = vmatprep.subr.mxu0 0.0
      %786 = vmatpush1.msra.mxu0 0.0
      %787 = vmatprep.subr.mxu0 0.0
      %788 = vmatpush1.msra.mxu0 0.0
      %789 = vmatprep.subr.mxu0 0.0
      %790 = vmatpush1.msra.mxu0 0.0
      %791 = vmatprep.subr.mxu0 0.0
      %792 = vmatpush1.msra.mxu0 0.0
      %793 = vmatprep.subr.mxu0 0.0
      %794 = vmatpush1.msra.mxu0 0.0
      %795 = vmatprep.subr.mxu0 0.0
      %796 = vmatpush1.msra.mxu0 0.0
      %797 = vmatprep.subr.mxu0 0.0
      %798 = vmatpush1.msra.mxu0 0.0
      %799 = vmatprep.subr.mxu0 0.0
      %800 = vmatpush1.msra.mxu0 0.0
      %801 = vmatprep.subr.mxu0 0.0
      %802 = vmatpush1.msra.mxu0 0.0
      %803 = vmatprep.subr.mxu0 0.0
      %804 = vmatpush1.msra.mxu0 0.0
      %805 = vmatprep.subr.mxu0 0.0
      %806 = vmatpush1.msra.mxu0 0.0
      %807 = vmatprep.subr.mxu0 0.0
      %808 = vmatpush1.msra.mxu0 0.0
      %809 = vmatprep.subr.mxu0 0.0
      %810 = vmatpush1.msra.mxu0 0.0
      %811 = vmatprep.subr.mxu0 0.0
      %812 = vmatpush1.msra.mxu0 0.0
      %813 = vmatprep.subr.mxu0 0.0
      %814 = vmatpush1.msra.mxu0 0.0
      %815 = vmatprep.subr.mxu0 0.0
      %816 = vmatpush1.msra.mxu0 0.0
      %817 = vmatprep.mubr.f32.mxu0 0.0
      %818 = vmatmul.mubr.f32.gmra.mrb[0].mxu0 %v747
      %v819 = vpop.f32.mrb[0].mxu0
      %v820 = vadd.f32 0.0, %v819
      %v821 = vpop.f32.mrb[0].mxu0
      %822 = vmatprep.mubr.f32.mxu0 0.0
      %823 = vmatmul.mubr.f32.gmra.mrb[0].mxu0 %v749
      %v824 = vpop.f32.mrb[0].mxu0
      %v825 = vadd.f32 0.0, %v824
      %v826 = vpop.f32.mrb[0].mxu0
      %827 = vmatprep.mubr.f32.mxu0 0.0
      %828 = vmatmul.mubr.f32.gmra.mrb[0].mxu0 %v751
      %v829 = vpop.f32.mrb[0].mxu0
      %v830 = vadd.f32 0.0, %v829
      %v831 = vpop.f32.mrb[0].mxu0
      %832 = vdwg.mxu0
      %v836 = vrot.slane %v820, 3
      %v837 = vrot.slane %v825, 3
      %v838 = vsel %vm611, %v836, %v837
      %v839 = vrot.slane %v830, 3
      %v840 = vsel %vm611, %v837, %v839
      %v845 = vadd.f32 %v733, %v836
      %v846 = vadd.f32 %v734, %v838
      %v847 = vadd.f32 %v735, %v840
      %v848 = vadd.f32 %v736, %v839
      %vm849 = vcmp.gt.f32.partialorder %v845, 0.0
      %vm850 = vcmp.gt.f32.partialorder %v846, 0.0
      %vm851 = vcmp.gt.f32.partialorder %v847, 0.0
      %vm852 = vcmp.gt.f32.partialorder %v848, 0.0
      %v853 = vmul.f32 %v845, 0.1
      %v854 = vmul.f32 %v846, 0.1
      %v855 = vmul.f32 %v847, 0.1
      %v856 = vmul.f32 %v848, 0.1
      %v857 = vsel %vm849, %v845, %v853
      %v858 = vsel %vm850, %v846, %v854
      %v859 = vsel %vm851, %v847, %v855
      %v860 = vsel %vm852, %v848, %v856
      %v861 = vmul.f32 %v857, %v477
      %v862 = vmul.f32 %v858, %v478
      %v863 = vmul.f32 %v859, %v479
      %v864 = vmul.f32 %v860, %v480
      %v865 = vld [vmem:[%s7] sm:$0x1]
      %v867 = vlaneseq
      %v868 = vshrl.u32 %v867, 7
      %v869 = vsub.s32 0, %v868
      %v870 = vrot.slane %v865, %v869
      %v872 = vadd.f32 %v846, %v870
      %v873 = vadd.f32 %v847, %v870
      %v874 = vld [vmem:[%s6] sm:$0xff]
      %v878 = vrot.slane %v861, 5
      %v879 = vrot.slane %v862, 5
      %v880 = vsel %vm627, %v878, %v879
      %v881 = vrot.slane %v863, 5
      %v882 = vsel %vm627, %v879, %v881
      %v883 = vsel %vm521, %v880, 0
      %v885 = vsel %vm521, %v882, 0
      %887 = vmatprep.subr.mxu0 0.0
      %888 = vmatpush1.msra.mxu0 %v874
      %889 = vmatprep.subr.mxu0 0.0
      %890 = vmatpush1.msra.mxu0 0.0
      %891 = vmatprep.subr.mxu0 0.0
      %892 = vmatpush1.msra.mxu0 0.0
      %893 = vmatprep.subr.mxu0 0.0
      %894 = vmatpush1.msra.mxu0 0.0
      %895 = vmatprep.subr.mxu0 0.0
      %896 = vmatpush1.msra.mxu0 0.0
      %897 = vmatprep.subr.mxu0 0.0
      %898 = vmatpush1.msra.mxu0 0.0
      %899 = vmatprep.subr.mxu0 0.0
      %900 = vmatpush1.msra.mxu0 0.0
      %901 = vmatprep.subr.mxu0 0.0
      %902 = vmatpush1.msra.mxu0 0.0
      %903 = vmatprep.subr.mxu0 0.0
      %904 = vmatpush1.msra.mxu0 0.0
      %905 = vmatprep.subr.mxu0 0.0
      %906 = vmatpush1.msra.mxu0 0.0
      %907 = vmatprep.subr.mxu0 0.0
      %908 = vmatpush1.msra.mxu0 0.0
      %909 = vmatprep.subr.mxu0 0.0
      %910 = vmatpush1.msra.mxu0 0.0
      %911 = vmatprep.subr.mxu0 0.0
      %912 = vmatpush1.msra.mxu0 0.0
      %913 = vmatprep.subr.mxu0 0.0
      %914 = vmatpush1.msra.mxu0 0.0
      %915 = vmatprep.subr.mxu0 0.0
      %916 = vmatpush1.msra.mxu0 0.0
      %917 = vmatprep.subr.mxu0 0.0
      %918 = vmatpush1.msra.mxu0 0.0
      %919 = vmatprep.subr.mxu0 0.0
      %920 = vmatpush1.msra.mxu0 0.0
      %921 = vmatprep.subr.mxu0 0.0
      %922 = vmatpush1.msra.mxu0 0.0
      %923 = vmatprep.subr.mxu0 0.0
      %924 = vmatpush1.msra.mxu0 0.0
      %925 = vmatprep.subr.mxu0 0.0
      %926 = vmatpush1.msra.mxu0 0.0
      %927 = vmatprep.subr.mxu0 0.0
      %928 = vmatpush1.msra.mxu0 0.0
      %929 = vmatprep.subr.mxu0 0.0
      %930 = vmatpush1.msra.mxu0 0.0
      %931 = vmatprep.subr.mxu0 0.0
      %932 = vmatpush1.msra.mxu0 0.0
      %933 = vmatprep.subr.mxu0 0.0
      %934 = vmatpush1.msra.mxu0 0.0
      %935 = vmatprep.subr.mxu0 0.0
      %936 = vmatpush1.msra.mxu0 0.0
      %937 = vmatprep.subr.mxu0 0.0
      %938 = vmatpush1.msra.mxu0 0.0
      %939 = vmatprep.subr.mxu0 0.0
      %940 = vmatpush1.msra.mxu0 0.0
      %941 = vmatprep.subr.mxu0 0.0
      %942 = vmatpush1.msra.mxu0 0.0
      %943 = vmatprep.subr.mxu0 0.0
      %944 = vmatpush1.msra.mxu0 0.0
      %945 = vmatprep.subr.mxu0 0.0
      %946 = vmatpush1.msra.mxu0 0.0
      %947 = vmatprep.subr.mxu0 0.0
      %948 = vmatpush1.msra.mxu0 0.0
      %949 = vmatprep.subr.mxu0 0.0
      %950 = vmatpush1.msra.mxu0 0.0
      %951 = vmatprep.mubr.f32.mxu0 0.0
      %952 = vmatmul.mubr.f32.gmra.mrb[0].mxu0 %v883
      %v953 = vpop.f32.mrb[0].mxu0
      %v954 = vadd.f32 0.0, %v953
      %v955 = vpop.f32.mrb[0].mxu0
      %956 = vmatprep.mubr.f32.mxu0 0.0
      %957 = vmatmul.mubr.f32.gmra.mrb[0].mxu0 %v885
      %v958 = vpop.f32.mrb[0].mxu0
      %v959 = vadd.f32 0.0, %v958
      %v960 = vpop.f32.mrb[0].mxu0
      %961 = vdwg.mxu0
      %v962 = vadd.f32 %v872, %v954
      %v963 = vadd.f32 %v873, %v959
      %s964 = scalar_lea.vmem %s6, 8
      %v965 = vld [vmem:[%s964] sm:$0xff]
      %v966 = vsel %vm521, %v862, 0
      %v968 = vsel %vm521, %v863, 0
      %970 = vmatprep.subr.mxu0 0.0
      %971 = vmatpush1.msra.mxu0 %v965
      %972 = vmatprep.subr.mxu0 0.0
      %973 = vmatpush1.msra.mxu0 0.0
      %974 = vmatprep.subr.mxu0 0.0
      %975 = vmatpush1.msra.mxu0 0.0
      %976 = vmatprep.subr.mxu0 0.0
      %977 = vmatpush1.msra.mxu0 0.0
      %978 = vmatprep.subr.mxu0 0.0
      %979 = vmatpush1.msra.mxu0 0.0
      %980 = vmatprep.subr.mxu0 0.0
      %981 = vmatpush1.msra.mxu0 0.0
      %982 = vmatprep.subr.mxu0 0.0
      %983 = vmatpush1.msra.mxu0 0.0
      %984 = vmatprep.subr.mxu0 0.0
      %985 = vmatpush1.msra.mxu0 0.0
      %986 = vmatprep.subr.mxu0 0.0
      %987 = vmatpush1.msra.mxu0 0.0
      %988 = vmatprep.subr.mxu0 0.0
      %989 = vmatpush1.msra.mxu0 0.0
      %990 = vmatprep.subr.mxu0 0.0
      %991 = vmatpush1.msra.mxu0 0.0
      %992 = vmatprep.subr.mxu0 0.0
      %993 = vmatpush1.msra.mxu0 0.0
      %994 = vmatprep.subr.mxu0 0.0
      %995 = vmatpush1.msra.mxu0 0.0
      %996 = vmatprep.subr.mxu0 0.0
      %997 = vmatpush1.msra.mxu0 0.0
      %998 = vmatprep.subr.mxu0 0.0
      %999 = vmatpush1.msra.mxu0 0.0
      %1000 = vmatprep.subr.mxu0 0.0
      %1001 = vmatpush1.msra.mxu0 0.0
      %1002 = vmatprep.subr.mxu0 0.0
      %1003 = vmatpush1.msra.mxu0 0.0
      %1004 = vmatprep.subr.mxu0 0.0
      %1005 = vmatpush1.msra.mxu0 0.0
      %1006 = vmatprep.subr.mxu0 0.0
      %1007 = vmatpush1.msra.mxu0 0.0
      %1008 = vmatprep.subr.mxu0 0.0
      %1009 = vmatpush1.msra.mxu0 0.0
      %1010 = vmatprep.subr.mxu0 0.0
      %1011 = vmatpush1.msra.mxu0 0.0
      %1012 = vmatprep.subr.mxu0 0.0
      %1013 = vmatpush1.msra.mxu0 0.0
      %1014 = vmatprep.subr.mxu0 0.0
      %1015 = vmatpush1.msra.mxu0 0.0
      %1016 = vmatprep.subr.mxu0 0.0
      %1017 = vmatpush1.msra.mxu0 0.0
      %1018 = vmatprep.subr.mxu0 0.0
      %1019 = vmatpush1.msra.mxu0 0.0
      %1020 = vmatprep.subr.mxu0 0.0
      %1021 = vmatpush1.msra.mxu0 0.0
      %1022 = vmatprep.subr.mxu0 0.0
      %1023 = vmatpush1.msra.mxu0 0.0
      %1024 = vmatprep.subr.mxu0 0.0
      %1025 = vmatpush1.msra.mxu0 0.0
      %1026 = vmatprep.subr.mxu0 0.0
      %1027 = vmatpush1.msra.mxu0 0.0
      %1028 = vmatprep.subr.mxu0 0.0
      %1029 = vmatpush1.msra.mxu0 0.0
      %1030 = vmatprep.subr.mxu0 0.0
      %1031 = vmatpush1.msra.mxu0 0.0
      %1032 = vmatprep.subr.mxu0 0.0
      %1033 = vmatpush1.msra.mxu0 0.0
      %1034 = vmatprep.mubr.f32.mxu0 0.0
      %1035 = vmatmul.mubr.f32.gmra.mrb[0].mxu0 %v966
      %v1036 = vpop.f32.mrb[0].mxu0
      %v1037 = vadd.f32 0.0, %v1036
      %v1038 = vpop.f32.mrb[0].mxu0
      %1039 = vmatprep.mubr.f32.mxu0 0.0
      %1040 = vmatmul.mubr.f32.gmra.mrb[0].mxu0 %v968
      %v1041 = vpop.f32.mrb[0].mxu0
      %v1042 = vadd.f32 0.0, %v1041
      %v1043 = vpop.f32.mrb[0].mxu0
      %1044 = vdwg.mxu0
      %v1045 = vadd.f32 %v962, %v1037
      %v1046 = vadd.f32 %v963, %v1042
      %s1047 = scalar_lea.vmem %s6, 16
      %v1048 = vld [vmem:[%s1047] sm:$0xff]
      %v1050 = vrot.slane %v862, 3
      %v1051 = vrot.slane %v863, 3
      %v1052 = vsel %vm611, %v1050, %v1051
      %v1053 = vrot.slane %v864, 3
      %v1054 = vsel %vm611, %v1051, %v1053
      %v1055 = vsel %vm521, %v1052, 0
      %v1057 = vsel %vm521, %v1054, 0
      %1059 = vmatprep.subr.mxu0 0.0
      %1060 = vmatpush1.msra.mxu0 %v1048
      %1061 = vmatprep.subr.mxu0 0.0
      %1062 = vmatpush1.msra.mxu0 0.0
      %1063 = vmatprep.subr.mxu0 0.0
      %1064 = vmatpush1.msra.mxu0 0.0
      %1065 = vmatprep.subr.mxu0 0.0
      %1066 = vmatpush1.msra.mxu0 0.0
      %1067 = vmatprep.subr.mxu0 0.0
      %1068 = vmatpush1.msra.mxu0 0.0
      %1069 = vmatprep.subr.mxu0 0.0
      %1070 = vmatpush1.msra.mxu0 0.0
      %1071 = vmatprep.subr.mxu0 0.0
      %1072 = vmatpush1.msra.mxu0 0.0
      %1073 = vmatprep.subr.mxu0 0.0
      %1074 = vmatpush1.msra.mxu0 0.0
      %1075 = vmatprep.subr.mxu0 0.0
      %1076 = vmatpush1.msra.mxu0 0.0
      %1077 = vmatprep.subr.mxu0 0.0
      %1078 = vmatpush1.msra.mxu0 0.0
      %1079 = vmatprep.subr.mxu0 0.0
      %1080 = vmatpush1.msra.mxu0 0.0
      %1081 = vmatprep.subr.mxu0 0.0
      %1082 = vmatpush1.msra.mxu0 0.0
      %1083 = vmatprep.subr.mxu0 0.0
      %1084 = vmatpush1.msra.mxu0 0.0
      %1085 = vmatprep.subr.mxu0 0.0
      %1086 = vmatpush1.msra.mxu0 0.0
      %1087 = vmatprep.subr.mxu0 0.0
      %1088 = vmatpush1.msra.mxu0 0.0
      %1089 = vmatprep.subr.mxu0 0.0
      %1090 = vmatpush1.msra.mxu0 0.0
      %1091 = vmatprep.subr.mxu0 0.0
      %1092 = vmatpush1.msra.mxu0 0.0
      %1093 = vmatprep.subr.mxu0 0.0
      %1094 = vmatpush1.msra.mxu0 0.0
      %1095 = vmatprep.subr.mxu0 0.0
      %1096 = vmatpush1.msra.mxu0 0.0
      %1097 = vmatprep.subr.mxu0 0.0
      %1098 = vmatpush1.msra.mxu0 0.0
      %1099 = vmatprep.subr.mxu0 0.0
      %1100 = vmatpush1.msra.mxu0 0.0
      %1101 = vmatprep.subr.mxu0 0.0
      %1102 = vmatpush1.msra.mxu0 0.0
      %1103 = vmatprep.subr.mxu0 0.0
      %1104 = vmatpush1.msra.mxu0 0.0
      %1105 = vmatprep.subr.mxu0 0.0
      %1106 = vmatpush1.msra.mxu0 0.0
      %1107 = vmatprep.subr.mxu0 0.0
      %1108 = vmatpush1.msra.mxu0 0.0
      %1109 = vmatprep.subr.mxu0 0.0
      %1110 = vmatpush1.msra.mxu0 0.0
      %1111 = vmatprep.subr.mxu0 0.0
      %1112 = vmatpush1.msra.mxu0 0.0
      %1113 = vmatprep.subr.mxu0 0.0
      %1114 = vmatpush1.msra.mxu0 0.0
      %1115 = vmatprep.subr.mxu0 0.0
      %1116 = vmatpush1.msra.mxu0 0.0
      %1117 = vmatprep.subr.mxu0 0.0
      %1118 = vmatpush1.msra.mxu0 0.0
      %1119 = vmatprep.subr.mxu0 0.0
      %1120 = vmatpush1.msra.mxu0 0.0
      %1121 = vmatprep.subr.mxu0 0.0
      %1122 = vmatpush1.msra.mxu0 0.0
      %1123 = vmatprep.mubr.f32.mxu0 0.0
      %1124 = vmatmul.mubr.f32.gmra.mrb[0].mxu0 %v1055
      %v1125 = vpop.f32.mrb[0].mxu0
      %v1126 = vadd.f32 0.0, %v1125
      %v1127 = vpop.f32.mrb[0].mxu0
      %1128 = vmatprep.mubr.f32.mxu0 0.0
      %1129 = vmatmul.mubr.f32.gmra.mrb[0].mxu0 %v1057
      %v1130 = vpop.f32.mrb[0].mxu0
      %v1131 = vadd.f32 0.0, %v1130
      %v1132 = vpop.f32.mrb[0].mxu0
      %1133 = vdwg.mxu0
      %v1134 = vadd.f32 %v1045, %v1126
      %v1135 = vadd.f32 %v1046, %v1131
      %v1136 = vmul.f32 %v1134, %v478
      %v1137 = vmul.f32 %v1135, %v479
      %1138 = vst.msk [vmem:[%s441] sm:$0xff] %vm521, %v1136
      %1139 = vst.msk [vmem:[%s441 + $0x8] sm:$0xff] %vm521, %v1137
      %s1140 = smul.u32 2, %s30
      %p1141 = scmp.lt.s32.totalorder %s29, 1
      %s1142 = scalar_select %p1141, %s29, 1
      %p1143 = scmp.lt.s32.totalorder %s1140, 3
      %s1144 = scalar_select %p1143, %s1140, 3
      %s1145 = smul.addr %s1142, 4
      %s1146 = sadd.s32 %s1144, %s1145
      %s1147 = smul.addr %s1146, 8
      %s1148 = scalar_lea.vmem %s8, %s1147
      // Predicated region
      $region49: #{tpu_custom_call.1} parent=47 // pred_check
        %p1149 = pneg %p241
      $region50: #{tpu_custom_call.1} parent=47 // pred_check_branch
        %1151 = sbr.rel (%p1149) target = $region52
      $region51: #{tpu_custom_call.1} parent=47 // pred_region
        %s1152 = smul.u32 2, %s30
      $region52: #{tpu_custom_call.1} parent=47 // pred_fallthru
        _
    $region48: #{tpu_custom_call.1} parent=5 // pred_fallthru
      _
    %p1153 = scmp.le.s32.totalorder 2, %s20
    // Predicated region
    $region53: #{tpu_custom_call.1} parent=5 // pred_check
      %p1154 = pneg %p1153
    $region54: #{tpu_custom_call.1} parent=5 // pred_check_branch
      %1156 = sbr.rel (%p1154) target = $region56
    $region55: #{tpu_custom_call.1} parent=5 // pred_region
      %s1157 = ssub.s32 %s20, 2
      // Predicated region
      $region57: #{tpu_custom_call.1} parent=55 // pred_check
        %p1158 = pneg %p247
      $region58: #{tpu_custom_call.1} parent=55 // pred_check_branch
        %1160 = sbr.rel (%p1158) target = $region60
      $region59: #{tpu_custom_call.1} parent=55 // pred_region
        %s1161 = smul.u32 2, %s32
        %p1162 = scmp.lt.s32.totalorder %s31, 1
        %s1163 = scalar_select %p1162, %s31, 1
        %p1164 = scmp.lt.s32.totalorder %s1161, 3
        %s1165 = scalar_select %p1164, %s1161, 3
        %s1166 = smul.addr %s1163, 4
        %s1167 = sadd.s32 %s1165, %s1166
        %s1168 = smul.addr %s1167, 8
        %s1169 = scalar_lea.vmem %s8, %s1168
      $region60: #{tpu_custom_call.1} parent=55 // pred_fallthru
        _
    $region56: #{tpu_custom_call.1} parent=5 // pred_fallthru
      _
  $region6: #{tpu_custom_call.1} parent=0 // loop_footer
    %s24 = sadd.s32 1, %s20
  $region7: #{tpu_custom_call.1} parent=0 // loop_footer_branch
    %19 = sbr.rel target = $region3
  $region8: #{tpu_custom_call.1} parent=0 // loop_exit
    _

</llo_original>
